<compile_context>
chip_gen: v6e
topology: v6e:2x2x1
jax: 0.10.0
libtpu: 0.0.40
codegen_flags: <defaults>
</compile_context>

<pallas_src>
import jax
import jax.numpy as jnp
from jax.experimental import pallas as pl
from jax.experimental.pallas import tpu as pltpu


def make_cnn_kernel(filter_sizes, batch, seq_len, n_filters, output_dim):
    n_conv = len(filter_sizes)
    cat_dim = n_conv * n_filters

    def kernel(*refs):
        # refs = (text2d, w_fs..., b_fs..., fc_w, fc_b, out)
        text_ref = refs[0]
        conv_w_refs = refs[1:1 + n_conv]
        conv_b_refs = refs[1 + n_conv:1 + 2 * n_conv]
        fcw_ref = refs[1 + 2 * n_conv]
        fcb_ref = refs[2 + 2 * n_conv]
        out_ref = refs[3 + 2 * n_conv]

        x = text_ref[...]                       # (B*S, E), batch folded into rows

        pooled_per_branch = []
        for ci, fs in enumerate(filter_sizes):
            W = conv_w_refs[ci][...]            # (fs*E, n_filters)  (im2col weight)
            b = conv_b_refs[ci][...]            # (1, n_filters)
            L = seq_len - fs + 1                # valid windows per sample
            R = batch * seq_len - fs + 1        # all window starts over folded rows

            # im2col: fs shifted slices concatenated along the lane axis.
            cols = jnp.concatenate([x[j:j + R, :] for j in range(fs)], axis=-1)

            # One MXU matmul per branch: (R, fs*E) @ (fs*E, n_filters).
            acc = jnp.dot(cols, W, preferred_element_type=jnp.float32) + b
            acc = jnp.maximum(acc, 0.0)         # ReLU

            # Global max-pool over the valid window positions of each sample.
            # Rows spanning a batch boundary are simply excluded from the slices.
            pooled = jnp.concatenate(
                [jnp.max(acc[bi * seq_len:bi * seq_len + L, :],
                         axis=0, keepdims=True)
                 for bi in range(batch)],
                axis=0)                          # (B, n_filters)
            pooled_per_branch.append(pooled)

        # Concatenate pooled features in-register (no scratch roundtrip).
        cat = jnp.concatenate(pooled_per_branch, axis=-1)        # (B, cat_dim)
        # TODO(synk): nn.Dropout is stochastic in training mode; eval-mode (identity) semantics used.

        logits = jnp.dot(cat, fcw_ref[...],
                         preferred_element_type=jnp.float32) + fcb_ref[...]

        # sigmoid(x) > 0.5  <=>  x > 0  (exact, incl. boundary); skip the EUP sigmoid.
        # TODO(synk): TPU has no native float64; emitting float32 0/1 instead of double.
        out_ref[...] = jnp.where(logits > 0.0, 1.0, 0.0).astype(out_ref.dtype)

    return kernel, cat_dim


def cnn_forward(text, conv_ws, conv_bs, fc_w, fc_b, filter_sizes):
    B, S, E = text.shape
    n_filters = conv_ws[0].shape[-1]
    output_dim = fc_w.shape[-1]
    filter_sizes = tuple(filter_sizes)
    kernel, _ = make_cnn_kernel(filter_sizes, B, S, n_filters, output_dim)

    # Wrapper-side layout plumbing only:
    #  - collapse (B, S, E) -> (B*S, E) (contiguous, zero-cost) so the kernel
    #    gets a single lane-dense 2-D operand with batch folded into M,
    #  - flatten each conv weight (fs, E, n_filters) -> (fs*E, n_filters) so
    #    the kernel-width contraction folds into the matmul K dimension.
    text2d = text.reshape(B * S, E)
    conv_w2d = [w.reshape(w.shape[0] * w.shape[1], w.shape[2]) for w in conv_ws]

    inputs = [text2d] + conv_w2d + list(conv_bs) + [fc_w, fc_b]
    in_specs = [pl.BlockSpec(memory_space=pltpu.MemorySpace.VMEM) for _ in inputs]
    out_spec = pl.BlockSpec(memory_space=pltpu.MemorySpace.VMEM)

    return pl.pallas_call(
        kernel,
        out_shape=jax.ShapeDtypeStruct((B, output_dim), jnp.float32),
        in_specs=in_specs,
        out_specs=out_spec,
    )(*inputs)


def ref_forward(text, conv_ws, conv_bs, fc_w, fc_b, filter_sizes):
    """Pure-JAX reference (same eval-mode semantics as the PyTorch module)."""
    B, S, E = text.shape
    pooled = []
    for W, b, fs in zip(conv_ws, conv_bs, filter_sizes):
        L = S - fs + 1
        acc = jnp.zeros((B, L, W.shape[-1]), jnp.float32)
        for j in range(fs):
            acc = acc + jnp.einsum('ble,ef->blf', text[:, j:j + L, :], W[j])
        acc = jax.nn.relu(acc + b[None])
        pooled.append(jnp.max(acc, axis=1))
    cat = jnp.concatenate(pooled, axis=1)
    logits = cat @ fc_w + fc_b
    probs = jax.nn.sigmoid(logits)
    return (probs > 0.5).astype(jnp.float32), logits


if __name__ == "__main__":
    key = jax.random.PRNGKey(0)

    # Small shapes consistent with the module's forward.
    B, S, E = 2, 16, 32          # batch, seq_len, embedding_dim
    n_filters = 8
    filter_sizes = (3, 4, 5)
    output_dim = 4

    keys = jax.random.split(key, 2 * len(filter_sizes) + 3)

    conv_ws, conv_bs = [], []
    for i, fs in enumerate(filter_sizes):
        # PyTorch Conv2d weight layout: (n_filters, 1, fs, E)
        w_t = 0.1 * jax.random.normal(keys[2 * i], (n_filters, 1, fs, E), jnp.float32)
        b_t = 0.1 * jax.random.normal(keys[2 * i + 1], (n_filters,), jnp.float32)
        conv_ws.append(jnp.transpose(w_t[:, 0], (1, 2, 0)))   # -> (fs, E, n_filters)
        conv_bs.append(b_t.reshape(1, n_filters))

    # PyTorch Linear weight layout: (output_dim, len(fs)*n_filters)
    fc_w_t = 0.1 * jax.random.normal(keys[-3], (output_dim, len(filter_sizes) * n_filters),
                                     jnp.float32)
    fc_b_t = 0.1 * jax.random.normal(keys[-2], (output_dim,), jnp.float32)
    fc_w = fc_w_t.T                          # (len(fs)*n_filters, output_dim)
    fc_b = fc_b_t.reshape(1, output_dim)

    text = jax.random.normal(keys[-1], (B, S, E), jnp.float32)

    out = cnn_forward(text, conv_ws, conv_bs, fc_w, fc_b, filter_sizes)
    jax.block_until_ready(out)

    ref, ref_logits = ref_forward(text, conv_ws, conv_bs, fc_w, fc_b, filter_sizes)
    assert out.shape == (B, output_dim)
    # Guard against decision-boundary ambiguity, then compare thresholded outputs.
    assert jnp.all(jnp.abs(ref_logits) > 1e-6), "logits too close to threshold for a robust test"
    assert jnp.allclose(out, ref), (out, ref)

    print("KERNEL_OK")
</pallas_src>

<mosaic_0001>
module attributes {stable_mosaic.version = 11 : i64} {
  func.func @kernel(%arg0: memref<32x32xf32, #tpu.memory_space<vmem>>, %arg1: memref<96x8xf32, #tpu.memory_space<vmem>>, %arg2: memref<128x8xf32, #tpu.memory_space<vmem>>, %arg3: memref<160x8xf32, #tpu.memory_space<vmem>>, %arg4: memref<1x8xf32, #tpu.memory_space<vmem>>, %arg5: memref<1x8xf32, #tpu.memory_space<vmem>>, %arg6: memref<1x8xf32, #tpu.memory_space<vmem>>, %arg7: memref<24x4xf32, #tpu.memory_space<vmem>>, %arg8: memref<1x4xf32, #tpu.memory_space<vmem>>, %arg9: memref<2x4xf32, #tpu.memory_space<vmem>>) attributes {dimension_semantics = [], scalar_prefetch = 0 : i64, scratch_operands = 0 : i64, tpu.core_type = #tpu.core_type<tc>} {
    %c0 = arith.constant 0 : index
    %c0_0 = arith.constant 0 : index
    %0 = vector.load %arg0[%c0, %c0_0] : memref<32x32xf32, #tpu.memory_space<vmem>>, vector<32x32xf32>
    %c0_1 = arith.constant 0 : index
    %c0_2 = arith.constant 0 : index
    %1 = vector.load %arg1[%c0_1, %c0_2] : memref<96x8xf32, #tpu.memory_space<vmem>>, vector<96x8xf32>
    %c0_3 = arith.constant 0 : index
    %c0_4 = arith.constant 0 : index
    %2 = vector.load %arg4[%c0_3, %c0_4] : memref<1x8xf32, #tpu.memory_space<vmem>>, vector<1x8xf32>
    %3 = vector.extract_strided_slice %0 {offsets = [0, 0], sizes = [30, 32], strides = [1, 1]} : vector<32x32xf32> to vector<30x32xf32>
    %4 = vector.extract_strided_slice %0 {offsets = [1, 0], sizes = [30, 32], strides = [1, 1]} : vector<32x32xf32> to vector<30x32xf32>
    %5 = vector.extract_strided_slice %0 {offsets = [2, 0], sizes = [30, 32], strides = [1, 1]} : vector<32x32xf32> to vector<30x32xf32>
    %6 = tpu.concatenate %3, %4, %5 in 1 : vector<30x32xf32>, vector<30x32xf32>, vector<30x32xf32> -> vector<30x96xf32>
    %cst = arith.constant dense<0.000000e+00> : vector<30x8xf32>
    %7 = tpu.matmul %6, %1, %cst {dimension_numbers = #tpu.dot_dimension_numbers<[1], [0], [0], [1], [0, 0, 1, 1], [], []>} : vector<30x96xf32>, vector<96x8xf32>, vector<30x8xf32> -> vector<30x8xf32>
    %8 = vector.broadcast %2 : vector<1x8xf32> to vector<30x8xf32>
    %9 = arith.addf %7, %8 : vector<30x8xf32>
    %cst_5 = arith.constant 0.000000e+00 : f32
    %10 = vector.broadcast %cst_5 : f32 to vector<30x8xf32>
    %11 = arith.maximumf %9, %10 : vector<30x8xf32>
    %12 = vector.extract_strided_slice %11 {offsets = [0, 0], sizes = [14, 8], strides = [1, 1]} : vector<30x8xf32> to vector<14x8xf32>
    %cst_6 = arith.constant dense<0xFF800000> : vector<8xf32>
    %13 = vector.multi_reduction <maximumf>, %12, %cst_6 [0] : vector<14x8xf32> to vector<8xf32>
    %14 = vector.shape_cast %13 : vector<8xf32> to vector<1x8xf32>
    %15 = vector.extract_strided_slice %11 {offsets = [16, 0], sizes = [14, 8], strides = [1, 1]} : vector<30x8xf32> to vector<14x8xf32>
    %cst_7 = arith.constant dense<0xFF800000> : vector<8xf32>
    %16 = vector.multi_reduction <maximumf>, %15, %cst_7 [0] : vector<14x8xf32> to vector<8xf32>
    %17 = vector.shape_cast %16 : vector<8xf32> to vector<1x8xf32>
    %18 = tpu.concatenate %14, %17 in 0 : vector<1x8xf32>, vector<1x8xf32> -> vector<2x8xf32>
    %c0_8 = arith.constant 0 : index
    %c0_9 = arith.constant 0 : index
    %19 = vector.load %arg2[%c0_8, %c0_9] : memref<128x8xf32, #tpu.memory_space<vmem>>, vector<128x8xf32>
    %c0_10 = arith.constant 0 : index
    %c0_11 = arith.constant 0 : index
    %20 = vector.load %arg5[%c0_10, %c0_11] : memref<1x8xf32, #tpu.memory_space<vmem>>, vector<1x8xf32>
    %21 = vector.extract_strided_slice %0 {offsets = [0, 0], sizes = [29, 32], strides = [1, 1]} : vector<32x32xf32> to vector<29x32xf32>
    %22 = vector.extract_strided_slice %0 {offsets = [1, 0], sizes = [29, 32], strides = [1, 1]} : vector<32x32xf32> to vector<29x32xf32>
    %23 = vector.extract_strided_slice %0 {offsets = [2, 0], sizes = [29, 32], strides = [1, 1]} : vector<32x32xf32> to vector<29x32xf32>
    %24 = vector.extract_strided_slice %0 {offsets = [3, 0], sizes = [29, 32], strides = [1, 1]} : vector<32x32xf32> to vector<29x32xf32>
    %25 = tpu.concatenate %21, %22, %23, %24 in 1 : vector<29x32xf32>, vector<29x32xf32>, vector<29x32xf32>, vector<29x32xf32> -> vector<29x128xf32>
    %cst_12 = arith.constant dense<0.000000e+00> : vector<29x8xf32>
    %26 = tpu.matmul %25, %19, %cst_12 {dimension_numbers = #tpu.dot_dimension_numbers<[1], [0], [0], [1], [0, 0, 1, 1], [], []>} : vector<29x128xf32>, vector<128x8xf32>, vector<29x8xf32> -> vector<29x8xf32>
    %27 = vector.broadcast %20 : vector<1x8xf32> to vector<29x8xf32>
    %28 = arith.addf %26, %27 : vector<29x8xf32>
    %cst_13 = arith.constant 0.000000e+00 : f32
    %29 = vector.broadcast %cst_13 : f32 to vector<29x8xf32>
    %30 = arith.maximumf %28, %29 : vector<29x8xf32>
    %31 = vector.extract_strided_slice %30 {offsets = [0, 0], sizes = [13, 8], strides = [1, 1]} : vector<29x8xf32> to vector<13x8xf32>
    %cst_14 = arith.constant dense<0xFF800000> : vector<8xf32>
    %32 = vector.multi_reduction <maximumf>, %31, %cst_14 [0] : vector<13x8xf32> to vector<8xf32>
    %33 = vector.shape_cast %32 : vector<8xf32> to vector<1x8xf32>
    %34 = vector.extract_strided_slice %30 {offsets = [16, 0], sizes = [13, 8], strides = [1, 1]} : vector<29x8xf32> to vector<13x8xf32>
    %cst_15 = arith.constant dense<0xFF800000> : vector<8xf32>
    %35 = vector.multi_reduction <maximumf>, %34, %cst_15 [0] : vector<13x8xf32> to vector<8xf32>
    %36 = vector.shape_cast %35 : vector<8xf32> to vector<1x8xf32>
    %37 = tpu.concatenate %33, %36 in 0 : vector<1x8xf32>, vector<1x8xf32> -> vector<2x8xf32>
    %c0_16 = arith.constant 0 : index
    %c0_17 = arith.constant 0 : index
    %38 = vector.load %arg3[%c0_16, %c0_17] : memref<160x8xf32, #tpu.memory_space<vmem>>, vector<160x8xf32>
    %c0_18 = arith.constant 0 : index
    %c0_19 = arith.constant 0 : index
    %39 = vector.load %arg6[%c0_18, %c0_19] : memref<1x8xf32, #tpu.memory_space<vmem>>, vector<1x8xf32>
    %40 = vector.extract_strided_slice %0 {offsets = [0, 0], sizes = [28, 32], strides = [1, 1]} : vector<32x32xf32> to vector<28x32xf32>
    %41 = vector.extract_strided_slice %0 {offsets = [1, 0], sizes = [28, 32], strides = [1, 1]} : vector<32x32xf32> to vector<28x32xf32>
    %42 = vector.extract_strided_slice %0 {offsets = [2, 0], sizes = [28, 32], strides = [1, 1]} : vector<32x32xf32> to vector<28x32xf32>
    %43 = vector.extract_strided_slice %0 {offsets = [3, 0], sizes = [28, 32], strides = [1, 1]} : vector<32x32xf32> to vector<28x32xf32>
    %44 = vector.extract_strided_slice %0 {offsets = [4, 0], sizes = [28, 32], strides = [1, 1]} : vector<32x32xf32> to vector<28x32xf32>
    %45 = tpu.concatenate %40, %41, %42, %43, %44 in 1 : vector<28x32xf32>, vector<28x32xf32>, vector<28x32xf32>, vector<28x32xf32>, vector<28x32xf32> -> vector<28x160xf32>
    %cst_20 = arith.constant dense<0.000000e+00> : vector<28x8xf32>
    %46 = tpu.matmul %45, %38, %cst_20 {dimension_numbers = #tpu.dot_dimension_numbers<[1], [0], [0], [1], [0, 0, 1, 1], [], []>} : vector<28x160xf32>, vector<160x8xf32>, vector<28x8xf32> -> vector<28x8xf32>
    %47 = vector.broadcast %39 : vector<1x8xf32> to vector<28x8xf32>
    %48 = arith.addf %46, %47 : vector<28x8xf32>
    %cst_21 = arith.constant 0.000000e+00 : f32
    %49 = vector.broadcast %cst_21 : f32 to vector<28x8xf32>
    %50 = arith.maximumf %48, %49 : vector<28x8xf32>
    %51 = vector.extract_strided_slice %50 {offsets = [0, 0], sizes = [12, 8], strides = [1, 1]} : vector<28x8xf32> to vector<12x8xf32>
    %cst_22 = arith.constant dense<0xFF800000> : vector<8xf32>
    %52 = vector.multi_reduction <maximumf>, %51, %cst_22 [0] : vector<12x8xf32> to vector<8xf32>
    %53 = vector.shape_cast %52 : vector<8xf32> to vector<1x8xf32>
    %54 = vector.extract_strided_slice %50 {offsets = [16, 0], sizes = [12, 8], strides = [1, 1]} : vector<28x8xf32> to vector<12x8xf32>
    %cst_23 = arith.constant dense<0xFF800000> : vector<8xf32>
    %55 = vector.multi_reduction <maximumf>, %54, %cst_23 [0] : vector<12x8xf32> to vector<8xf32>
    %56 = vector.shape_cast %55 : vector<8xf32> to vector<1x8xf32>
    %57 = tpu.concatenate %53, %56 in 0 : vector<1x8xf32>, vector<1x8xf32> -> vector<2x8xf32>
    %58 = tpu.concatenate %18, %37, %57 in 1 : vector<2x8xf32>, vector<2x8xf32>, vector<2x8xf32> -> vector<2x24xf32>
    %c0_24 = arith.constant 0 : index
    %c0_25 = arith.constant 0 : index
    %59 = vector.load %arg7[%c0_24, %c0_25] : memref<24x4xf32, #tpu.memory_space<vmem>>, vector<24x4xf32>
    %cst_26 = arith.constant dense<0.000000e+00> : vector<2x4xf32>
    %60 = tpu.matmul %58, %59, %cst_26 {dimension_numbers = #tpu.dot_dimension_numbers<[1], [0], [0], [1], [0, 0, 1, 1], [], []>} : vector<2x24xf32>, vector<24x4xf32>, vector<2x4xf32> -> vector<2x4xf32>
    %c0_27 = arith.constant 0 : index
    %c0_28 = arith.constant 0 : index
    %61 = vector.load %arg8[%c0_27, %c0_28] : memref<1x4xf32, #tpu.memory_space<vmem>>, vector<1x4xf32>
    %62 = vector.broadcast %61 : vector<1x4xf32> to vector<2x4xf32>
    %63 = arith.addf %60, %62 : vector<2x4xf32>
    %cst_29 = arith.constant 0.000000e+00 : f32
    %64 = vector.broadcast %cst_29 : f32 to vector<2x4xf32>
    %65 = arith.cmpf ogt, %63, %64 : vector<2x4xf32>
    %cst_30 = arith.constant 1.000000e+00 : f32
    %cst_31 = arith.constant 0.000000e+00 : f32
    %66 = vector.broadcast %cst_30 : f32 to vector<2x4xf32>
    %67 = vector.broadcast %cst_31 : f32 to vector<2x4xf32>
    %68 = arith.select %65, %66, %67 : vector<2x4xi1>, vector<2x4xf32>
    %c0_32 = arith.constant 0 : index
    %c0_33 = arith.constant 0 : index
    %69 = vector.load %arg9[%c0_32, %c0_33] : memref<2x4xf32, #tpu.memory_space<vmem>>, vector<2x4xf32>
    tpu.vector_store %arg9[%c0_32, %c0_33], %68 {strides = array<i32>} : memref<2x4xf32, #tpu.memory_space<vmem>>, vector<2x4xf32>,
    return
  }
}

</mosaic_0001>

<llo_original>
// kernel: tpu_custom_call.1
$region0: #{tpu_custom_call.1}
  #allocation0 [shape = 'u32[]', space=smem, size = 0x4, offset = 0x4, fixed_abs, tag = 'smem constant byte address 0x4 - core index']
  #allocation1 [shape = 'u32[144,128]{1,0:T(1,128)}', space=vmem, size = 0x12000, scoped, tag = 'internal scratch']
  %s0 = inlined_call_operand.vmem [shape: f32[32,32], index: 0, kind: input, shape index: {}]
  %s1 = inlined_call_operand.vmem [shape: f32[96,8], index: 1, kind: input, shape index: {}]
  %s2 = inlined_call_operand.vmem [shape: f32[128,8], index: 2, kind: input, shape index: {}]
  %s3 = inlined_call_operand.vmem [shape: f32[160,8], index: 3, kind: input, shape index: {}]
  %s4 = inlined_call_operand.vmem [shape: f32[1,8], index: 4, kind: input, shape index: {}]
  %s5 = inlined_call_operand.vmem [shape: f32[1,8], index: 5, kind: input, shape index: {}]
  %s6 = inlined_call_operand.vmem [shape: f32[1,8], index: 6, kind: input, shape index: {}]
  %s7 = inlined_call_operand.vmem [shape: f32[24,4], index: 7, kind: input, shape index: {}]
  %s8 = inlined_call_operand.vmem [shape: f32[1,4], index: 8, kind: input, shape index: {}]
  %s9 = inlined_call_operand.hbm [shape: f32[2,4], index: 9, kind: output, shape index: {}]
  %s10 = sld [smem:[#allocation0]]
  $region46: #{tpu_custom_call.1} parent=0
    _
  %s12 = ssub.s32 1, %s10
  %s13 = scalar_select 0, %s12, %s10
  $region1: #{tpu_custom_call.1} parent=0
    #allocation2 [shape = 'u8[1024]{0}', space=vmem, size = 0x400, scoped, tag = 'output window, operand 0, single buffered']
    #allocation3 [shape = 's32[1]{0}', space=sflag, size = 0x4, scoped, tag = 'scoped memory for tpu_custom_call.1']
    %14 = vsyncpa [#allocation3], 0
    // Predicated region
    $region2: #{tpu_custom_call.1} parent=1 // pred_check
      _
    $region3: #{tpu_custom_call.1} parent=1 // pred_check_branch
      %16 = sbr.rel (0) target = $region5
    $region4: #{tpu_custom_call.1} parent=1 // pred_region
      _
    $region5: #{tpu_custom_call.1} parent=1 // pred_fallthru
      _
    // Predicated region
    $region6: #{tpu_custom_call.1} parent=1 // pred_check
      _
    $region7: #{tpu_custom_call.1} parent=1 // pred_check_branch
      %18 = sbr.rel (0) target = $region9
    $region8: #{tpu_custom_call.1} parent=1 // pred_region
      _
    $region9: #{tpu_custom_call.1} parent=1 // pred_fallthru
      _
    // Predicated region
    $region10: #{tpu_custom_call.1} parent=1 // pred_check
      _
    $region11: #{tpu_custom_call.1} parent=1 // pred_check_branch
      %20 = sbr.rel (0) target = $region13
    $region12: #{tpu_custom_call.1} parent=1 // pred_region
      _
    $region13: #{tpu_custom_call.1} parent=1 // pred_fallthru
      _
    // Predicated region
    $region14: #{tpu_custom_call.1} parent=1 // pred_check
      _
    $region15: #{tpu_custom_call.1} parent=1 // pred_check_branch
      %22 = sbr.rel (0) target = $region17
    $region16: #{tpu_custom_call.1} parent=1 // pred_region
      _
    $region17: #{tpu_custom_call.1} parent=1 // pred_fallthru
      _
    // Predicated region
    $region18: #{tpu_custom_call.1} parent=1 // pred_check
      _
    $region19: #{tpu_custom_call.1} parent=1 // pred_check_branch
      %24 = sbr.rel (0) target = $region21
    $region20: #{tpu_custom_call.1} parent=1 // pred_region
      _
    $region21: #{tpu_custom_call.1} parent=1 // pred_fallthru
      _
    // Predicated region
    $region22: #{tpu_custom_call.1} parent=1 // pred_check
      _
    $region23: #{tpu_custom_call.1} parent=1 // pred_check_branch
      %26 = sbr.rel (0) target = $region25
    $region24: #{tpu_custom_call.1} parent=1 // pred_region
      _
    $region25: #{tpu_custom_call.1} parent=1 // pred_fallthru
      _
    // Predicated region
    $region26: #{tpu_custom_call.1} parent=1 // pred_check
      _
    $region27: #{tpu_custom_call.1} parent=1 // pred_check_branch
      %28 = sbr.rel (0) target = $region29
    $region28: #{tpu_custom_call.1} parent=1 // pred_region
      _
    $region29: #{tpu_custom_call.1} parent=1 // pred_fallthru
      _
    // Predicated region
    $region30: #{tpu_custom_call.1} parent=1 // pred_check
      _
    $region31: #{tpu_custom_call.1} parent=1 // pred_check_branch
      %30 = sbr.rel (0) target = $region33
    $region32: #{tpu_custom_call.1} parent=1 // pred_region
      _
    $region33: #{tpu_custom_call.1} parent=1 // pred_fallthru
      _
    // Predicated region
    $region34: #{tpu_custom_call.1} parent=1 // pred_check
      _
    $region35: #{tpu_custom_call.1} parent=1 // pred_check_branch
      %32 = sbr.rel (0) target = $region37
    $region36: #{tpu_custom_call.1} parent=1 // pred_region
      _
    $region37: #{tpu_custom_call.1} parent=1 // pred_fallthru
      _
    %v33 = vld [vmem:[%s0] sm:$0xff]
    %v34 = vld [vmem:[%s0 + $0x8] sm:$0xff]
    %v35 = vld [vmem:[%s0 + $0x10] sm:$0xff]
    %v36 = vld [vmem:[%s0 + $0x18] sm:$0xff]
    %v37 = vld [vmem:[%s1] sm:$0xff]
    %v38 = vld [vmem:[%s1 + $0x8] sm:$0xff]
    %v39 = vld [vmem:[%s1 + $0x10] sm:$0xff]
    %v40 = vld [vmem:[%s1 + $0x18] sm:$0xff]
    %v41 = vld [vmem:[%s1 + $0x20] sm:$0xff]
    %v42 = vld [vmem:[%s1 + $0x28] sm:$0xff]
    %v43 = vld [vmem:[%s1 + $0x30] sm:$0xff]
    %v44 = vld [vmem:[%s1 + $0x38] sm:$0xff]
    %v45 = vld [vmem:[%s1 + $0x40] sm:$0xff]
    %v46 = vld [vmem:[%s1 + $0x48] sm:$0xff]
    %v47 = vld [vmem:[%s1 + $0x50] sm:$0xff]
    %v48 = vld [vmem:[%s1 + $0x58] sm:$0xff]
    %v49 = vld [vmem:[%s4] sm:$0x1]
    %vm54 = vcmask 1046528
    %v55 = vrot.slane %v33, 1
    %v56 = vrot.slane %v34, 1
    %v57 = vsel %vm54, %v55, %v56
    %v58 = vrot.slane %v35, 1
    %v59 = vsel %vm54, %v56, %v58
    %v60 = vrot.slane %v36, 1
    %v61 = vsel %vm54, %v58, %v60
    %62 = vrot.lane.b32.xlu0 %v57, 32
    %v63 = vpop.permute.xlu0 %62
    %64 = vrot.lane.b32.xlu0 %v59, 32
    %v65 = vpop.permute.xlu0 %64
    %66 = vrot.lane.b32.xlu0 %v61, 32
    %v67 = vpop.permute.xlu0 %66
    %68 = vrot.lane.b32.xlu0 %v60, 32
    %v69 = vpop.permute.xlu0 %68
    %vm74 = vcmask 1045504
    %v75 = vrot.slane %v33, 2
    %v76 = vrot.slane %v34, 2
    %v77 = vsel %vm74, %v75, %v76
    %v78 = vrot.slane %v35, 2
    %v79 = vsel %vm74, %v76, %v78
    %v80 = vrot.slane %v36, 2
    %v81 = vsel %vm74, %v78, %v80
    %82 = vrot.lane.b32.xlu0 %v77, 64
    %v83 = vpop.permute.xlu0 %82
    %84 = vrot.lane.b32.xlu0 %v79, 64
    %v85 = vpop.permute.xlu0 %84
    %86 = vrot.lane.b32.xlu0 %v81, 64
    %v87 = vpop.permute.xlu0 %86
    %88 = vrot.lane.b32.xlu0 %v80, 64
    %v89 = vpop.permute.xlu0 %88
    %vm94 = vcmask 261120
    %v95 = vsel %vm94, %v33, %v63
    %v96 = vsel %vm94, %v34, %v65
    %v97 = vsel %vm94, %v35, %v67
    %v98 = vsel %vm94, %v36, %v69
    %vm99 = vcmask 523264
    %v100 = vsel %vm99, %v95, %v83
    %v101 = vsel %vm99, %v96, %v85
    %v102 = vsel %vm99, %v97, %v87
    %v103 = vsel %vm99, %v98, %v89
    %v105 = vlaneseq
    %v106 = vshrl.u32 %v105, 7
    %v107 = vsub.s32 0, %v106
    %v108 = vrot.slane %v49, %v107
    %vm110 = vcmask 785408
    %v112 = vsel %vm110, %v100, 0
    %v115 = vsel %vm110, %v101, 0
    %v118 = vsel %vm110, %v102, 0
    %v121 = vsel %vm110, %v103, 0
    %123 = vmatprep.subr.mxu0 0.0
    %124 = vmatpush1.msra.mxu0 0.0
    %125 = vmatprep.subr.mxu0 0.0
    %126 = vmatpush1.msra.mxu0 0.0
    %127 = vmatprep.subr.mxu0 0.0
    %128 = vmatpush1.msra.mxu0 0.0
    %129 = vmatprep.subr.mxu0 0.0
    %130 = vmatpush1.msra.mxu0 0.0
    %131 = vmatprep.subr.mxu0 0.0
    %132 = vmatpush1.msra.mxu0 %v48
    %133 = vmatprep.subr.mxu0 0.0
    %134 = vmatpush1.msra.mxu0 %v47
    %135 = vmatprep.subr.mxu0 0.0
    %136 = vmatpush1.msra.mxu0 %v46
    %137 = vmatprep.subr.mxu0 0.0
    %138 = vmatpush1.msra.mxu0 %v45
    %139 = vmatprep.subr.mxu0 0.0
    %140 = vmatpush1.msra.mxu0 %v44
    %141 = vmatprep.subr.mxu0 0.0
    %142 = vmatpush1.msra.mxu0 %v43
    %143 = vmatprep.subr.mxu0 0.0
    %144 = vmatpush1.msra.mxu0 %v42
    %145 = vmatprep.subr.mxu0 0.0
    %146 = vmatpush1.msra.mxu0 %v41
    %147 = vmatprep.subr.mxu0 0.0
    %148 = vmatpush1.msra.mxu0 %v40
    %149 = vmatprep.subr.mxu0 0.0
    %150 = vmatpush1.msra.mxu0 %v39
    %151 = vmatprep.subr.mxu0 0.0
    %152 = vmatpush1.msra.mxu0 %v38
    %153 = vmatprep.subr.mxu0 0.0
    %154 = vmatpush1.msra.mxu0 %v37
    %155 = vmatprep.subr.mxu0 0.0
    %156 = vmatpush2.msra.mxu0 0.0
    %157 = vmatprep.subr.mxu0 0.0
    %158 = vmatpush2.msra.mxu0 0.0
    %159 = vmatprep.subr.mxu0 0.0
    %160 = vmatpush2.msra.mxu0 0.0
    %161 = vmatprep.subr.mxu0 0.0
    %162 = vmatpush2.msra.mxu0 0.0
    %163 = vmatprep.subr.mxu0 0.0
    %164 = vmatpush2.msra.mxu0 0.0
    %165 = vmatprep.subr.mxu0 0.0
    %166 = vmatpush2.msra.mxu0 0.0
    %167 = vmatprep.subr.mxu0 0.0
    %168 = vmatpush2.msra.mxu0 0.0
    %169 = vmatprep.subr.mxu0 0.0
    %170 = vmatpush2.msra.mxu0 0.0
    %171 = vmatprep.subr.mxu0 0.0
    %172 = vmatpush2.msra.mxu0 0.0
    %173 = vmatprep.subr.mxu0 0.0
    %174 = vmatpush2.msra.mxu0 0.0
    %175 = vmatprep.subr.mxu0 0.0
    %176 = vmatpush2.msra.mxu0 0.0
    %177 = vmatprep.subr.mxu0 0.0
    %178 = vmatpush2.msra.mxu0 0.0
    %179 = vmatprep.subr.mxu0 0.0
    %180 = vmatpush2.msra.mxu0 0.0
    %181 = vmatprep.subr.mxu0 0.0
    %182 = vmatpush2.msra.mxu0 0.0
    %183 = vmatprep.subr.mxu0 0.0
    %184 = vmatpush2.msra.mxu0 0.0
    %185 = vmatprep.subr.mxu0 0.0
    %186 = vmatpush2.msra.mxu0 0.0
    %187 = vmatprep.mubr.f32.mxu0 0.0
    %188 = vmatmul.mubr.f32.gmra.mxu0 %v112
    %v189 = vpop.f32.mrf.mxu0
    %v190 = vadd.f32 %v108, %v189
    %v191 = vpop.f32.mrf.mxu0
    %192 = vmatprep.mubr.f32.mxu0 0.0
    %193 = vmatmul.mubr.f32.gmra.mxu0 %v115
    %v194 = vpop.f32.mrf.mxu0
    %v195 = vadd.f32 %v108, %v194
    %v196 = vpop.f32.mrf.mxu0
    %197 = vmatprep.mubr.f32.mxu0 0.0
    %198 = vmatmul.mubr.f32.gmra.mxu0 %v118
    %v199 = vpop.f32.mrf.mxu0
    %v200 = vadd.f32 %v108, %v199
    %v201 = vpop.f32.mrf.mxu0
    %202 = vmatprep.mubr.f32.mxu0 0.0
    %203 = vmatmul.mubr.f32.gmra.mxu0 %v121
    %v204 = vpop.f32.mrf.mxu0
    %v205 = vadd.f32 %v108, %v204
    %v206 = vpop.f32.mrf.mxu0
    %207 = vdwg.mxu0
    %v208 = vmax.f32 %v190, 0.0
    %v209 = vmax.f32 %v195, 0.0
    %v210 = vmax.f32 %v200, 0.0
    %v211 = vmax.f32 %v205, 0.0
    %vm212 = vcmask 64512
    %v213 = vsel %vm212, %v208, -inf
    %vm214 = vcmask 62464
    %v215 = vsel %vm214, %v209, -inf
    %v216 = vmax.f32 %v213, %v215
    %v217 = vrot.slane %v216, 4
    %v218 = vmax.f32 %v216, %v217
    %v219 = vrot.slane %v218, 2
    %v220 = vmax.f32 %v218, %v219
    %v221 = vrot.slane %v220, 1
    %v222 = vmax.f32 %v220, %v221
    %v223 = vsel %vm212, %v210, -inf
    %v224 = vsel %vm214, %v211, -inf
    %v225 = vmax.f32 %v223, %v224
    %v226 = vrot.slane %v225, 4
    %v227 = vmax.f32 %v225, %v226
    %v228 = vrot.slane %v227, 2
    %v229 = vmax.f32 %v227, %v228
    %v230 = vrot.slane %v229, 1
    %v231 = vmax.f32 %v229, %v230
    %vm232 = vcmask 1040384
    %v233 = vsel %vm232, %v222, %v231
    %v234 = vld [vmem:[%s2] sm:$0xff]
    %v235 = vld [vmem:[%s2 + $0x8] sm:$0xff]
    %v236 = vld [vmem:[%s2 + $0x10] sm:$0xff]
    %v237 = vld [vmem:[%s2 + $0x18] sm:$0xff]
    %v238 = vld [vmem:[%s2 + $0x20] sm:$0xff]
    %v239 = vld [vmem:[%s2 + $0x28] sm:$0xff]
    %v240 = vld [vmem:[%s2 + $0x30] sm:$0xff]
    %v241 = vld [vmem:[%s2 + $0x38] sm:$0xff]
    %v242 = vld [vmem:[%s2 + $0x40] sm:$0xff]
    %v243 = vld [vmem:[%s2 + $0x48] sm:$0xff]
    %v244 = vld [vmem:[%s2 + $0x50] sm:$0xff]
    %v245 = vld [vmem:[%s2 + $0x58] sm:$0xff]
    %v246 = vld [vmem:[%s2 + $0x60] sm:$0xff]
    %v247 = vld [vmem:[%s2 + $0x68] sm:$0xff]
    %v248 = vld [vmem:[%s2 + $0x70] sm:$0xff]
    %v249 = vld [vmem:[%s2 + $0x78] sm:$0xff]
    %v250 = vld [vmem:[%s5] sm:$0x1]
    %vm251 = vcmask 1044480
    %v252 = vrot.slane %v33, 3
    %v253 = vrot.slane %v34, 3
    %v254 = vsel %vm251, %v252, %v253
    %v255 = vrot.slane %v35, 3
    %v256 = vsel %vm251, %v253, %v255
    %v257 = vrot.slane %v36, 3
    %v258 = vsel %vm251, %v255, %v257
    %259 = vrot.lane.b32.xlu0 %v254, 96
    %v260 = vpop.permute.xlu0 %259
    %261 = vrot.lane.b32.xlu0 %v256, 96
    %v262 = vpop.permute.xlu0 %261
    %263 = vrot.lane.b32.xlu0 %v258, 96
    %v264 = vpop.permute.xlu0 %263
    %265 = vrot.lane.b32.xlu0 %v257, 96
    %v266 = vpop.permute.xlu0 %265
    %v271 = vsel %vm110, %v100, %v260
    %v272 = vsel %vm110, %v101, %v262
    %v273 = vsel %vm110, %v102, %v264
    %v274 = vsel %vm110, %v103, %v266
    %v276 = vlaneseq
    %v277 = vshrl.u32 %v276, 7
    %v278 = vsub.s32 0, %v277
    %v279 = vrot.slane %v250, %v278
    %281 = vmatprep.subr.mxu0 0.0
    %282 = vmatpush1.msra.mxu0 %v249
    %283 = vmatprep.subr.mxu0 0.0
    %284 = vmatpush1.msra.mxu0 %v248
    %285 = vmatprep.subr.mxu0 0.0
    %286 = vmatpush1.msra.mxu0 %v247
    %287 = vmatprep.subr.mxu0 0.0
    %288 = vmatpush1.msra.mxu0 %v246
    %289 = vmatprep.subr.mxu0 0.0
    %290 = vmatpush1.msra.mxu0 %v245
    %291 = vmatprep.subr.mxu0 0.0
    %292 = vmatpush1.msra.mxu0 %v244
    %293 = vmatprep.subr.mxu0 0.0
    %294 = vmatpush1.msra.mxu0 %v243
    %295 = vmatprep.subr.mxu0 0.0
    %296 = vmatpush1.msra.mxu0 %v242
    %297 = vmatprep.subr.mxu0 0.0
    %298 = vmatpush1.msra.mxu0 %v241
    %299 = vmatprep.subr.mxu0 0.0
    %300 = vmatpush1.msra.mxu0 %v240
    %301 = vmatprep.subr.mxu0 0.0
    %302 = vmatpush1.msra.mxu0 %v239
    %303 = vmatprep.subr.mxu0 0.0
    %304 = vmatpush1.msra.mxu0 %v238
    %305 = vmatprep.subr.mxu0 0.0
    %306 = vmatpush1.msra.mxu0 %v237
    %307 = vmatprep.subr.mxu0 0.0
    %308 = vmatpush1.msra.mxu0 %v236
    %309 = vmatprep.subr.mxu0 0.0
    %310 = vmatpush1.msra.mxu0 %v235
    %311 = vmatprep.subr.mxu0 0.0
    %312 = vmatpush1.msra.mxu0 %v234
    %313 = vmatprep.subr.mxu0 0.0
    %314 = vmatpush2.msra.mxu0 0.0
    %315 = vmatprep.subr.mxu0 0.0
    %316 = vmatpush2.msra.mxu0 0.0
    %317 = vmatprep.subr.mxu0 0.0
    %318 = vmatpush2.msra.mxu0 0.0
    %319 = vmatprep.subr.mxu0 0.0
    %320 = vmatpush2.msra.mxu0 0.0
    %321 = vmatprep.subr.mxu0 0.0
    %322 = vmatpush2.msra.mxu0 0.0
    %323 = vmatprep.subr.mxu0 0.0
    %324 = vmatpush2.msra.mxu0 0.0
    %325 = vmatprep.subr.mxu0 0.0
    %326 = vmatpush2.msra.mxu0 0.0
    %327 = vmatprep.subr.mxu0 0.0
    %328 = vmatpush2.msra.mxu0 0.0
    %329 = vmatprep.subr.mxu0 0.0
    %330 = vmatpush2.msra.mxu0 0.0
    %331 = vmatprep.subr.mxu0 0.0
    %332 = vmatpush2.msra.mxu0 0.0
    %333 = vmatprep.subr.mxu0 0.0
    %334 = vmatpush2.msra.mxu0 0.0
    %335 = vmatprep.subr.mxu0 0.0
    %336 = vmatpush2.msra.mxu0 0.0
    %337 = vmatprep.subr.mxu0 0.0
    %338 = vmatpush2.msra.mxu0 0.0
    %339 = vmatprep.subr.mxu0 0.0
    %340 = vmatpush2.msra.mxu0 0.0
    %341 = vmatprep.subr.mxu0 0.0
    %342 = vmatpush2.msra.mxu0 0.0
    %343 = vmatprep.subr.mxu0 0.0
    %344 = vmatpush2.msra.mxu0 0.0
    %345 = vmatprep.mubr.f32.mxu0 0.0
    %346 = vmatmul.mubr.f32.gmra.mxu0 %v271
    %v347 = vpop.f32.mrf.mxu0
    %v348 = vadd.f32 %v279, %v347
    %v349 = vpop.f32.mrf.mxu0
    %350 = vmatprep.mubr.f32.mxu0 0.0
    %351 = vmatmul.mubr.f32.gmra.mxu0 %v272
    %v352 = vpop.f32.mrf.mxu0
    %v353 = vadd.f32 %v279, %v352
    %v354 = vpop.f32.mrf.mxu0
    %355 = vmatprep.mubr.f32.mxu0 0.0
    %356 = vmatmul.mubr.f32.gmra.mxu0 %v273
    %v357 = vpop.f32.mrf.mxu0
    %v358 = vadd.f32 %v279, %v357
    %v359 = vpop.f32.mrf.mxu0
    %360 = vmatprep.mubr.f32.mxu0 0.0
    %361 = vmatmul.mubr.f32.gmra.mxu0 %v274
    %v362 = vpop.f32.mrf.mxu0
    %v363 = vadd.f32 %v279, %v362
    %v364 = vpop.f32.mrf.mxu0
    %365 = vdwg.mxu0
    %v366 = vmax.f32 %v348, 0.0
    %v367 = vmax.f32 %v353, 0.0
    %v368 = vmax.f32 %v358, 0.0
    %v369 = vmax.f32 %v363, 0.0
    %v370 = vsel %vm212, %v366, -inf
    %vm371 = vcmask 61440
    %v372 = vsel %vm371, %v367, -inf
    %v373 = vmax.f32 %v370, %v372
    %v374 = vrot.slane %v373, 4
    %v375 = vmax.f32 %v373, %v374
    %v376 = vrot.slane %v375, 2
    %v377 = vmax.f32 %v375, %v376
    %v378 = vrot.slane %v377, 1
    %v379 = vmax.f32 %v377, %v378
    %v380 = vsel %vm212, %v368, -inf
    %v381 = vsel %vm371, %v369, -inf
    %v382 = vmax.f32 %v380, %v381
    %v383 = vrot.slane %v382, 4
    %v384 = vmax.f32 %v382, %v383
    %v385 = vrot.slane %v384, 2
    %v386 = vmax.f32 %v384, %v385
    %v387 = vrot.slane %v386, 1
    %v388 = vmax.f32 %v386, %v387
    %v389 = vsel %vm232, %v379, %v388
    %v390 = vld [vmem:[%s3] sm:$0xff]
    %v391 = vld [vmem:[%s3 + $0x8] sm:$0xff]
    %v392 = vld [vmem:[%s3 + $0x10] sm:$0xff]
    %v393 = vld [vmem:[%s3 + $0x18] sm:$0xff]
    %v394 = vld [vmem:[%s3 + $0x20] sm:$0xff]
    %v395 = vld [vmem:[%s3 + $0x28] sm:$0xff]
    %v396 = vld [vmem:[%s3 + $0x30] sm:$0xff]
    %v397 = vld [vmem:[%s3 + $0x38] sm:$0xff]
    %v398 = vld [vmem:[%s3 + $0x40] sm:$0xff]
    %v399 = vld [vmem:[%s3 + $0x48] sm:$0xff]
    %v400 = vld [vmem:[%s3 + $0x50] sm:$0xff]
    %v401 = vld [vmem:[%s3 + $0x58] sm:$0xff]
    %v402 = vld [vmem:[%s3 + $0x60] sm:$0xff]
    %v403 = vld [vmem:[%s3 + $0x68] sm:$0xff]
    %v404 = vld [vmem:[%s3 + $0x70] sm:$0xff]
    %v405 = vld [vmem:[%s3 + $0x78] sm:$0xff]
    %v406 = vld [vmem:[%s3 + $0x80] sm:$0xff]
    %v407 = vld [vmem:[%s3 + $0x88] sm:$0xff]
    %v408 = vld [vmem:[%s3 + $0x90] sm:$0xff]
    %v409 = vld [vmem:[%s3 + $0x98] sm:$0xff]
    %v410 = vld [vmem:[%s6] sm:$0x1]
    %vm411 = vcmask 1043456
    %v412 = vrot.slane %v33, 4
    %v413 = vrot.slane %v34, 4
    %v414 = vsel %vm411, %v412, %v413
    %v415 = vrot.slane %v35, 4
    %v416 = vsel %vm411, %v413, %v415
    %v417 = vrot.slane %v36, 4
    %v418 = vsel %vm411, %v415, %v417
    %v420 = vlaneseq
    %v421 = vshrl.u32 %v420, 7
    %v422 = vsub.s32 0, %v421
    %v423 = vrot.slane %v410, %v422
    %v425 = vsel %vm94, %v414, 0
    %v427 = vsel %vm94, %v416, 0
    %v429 = vsel %vm94, %v418, 0
    %v431 = vsel %vm94, %v417, 0
    %433 = vmatprep.subr.mxu0 0.0
    %434 = vmatpush1.msra.mxu0 %v405
    %435 = vmatprep.subr.mxu0 0.0
    %436 = vmatpush1.msra.mxu0 %v404
    %437 = vmatprep.subr.mxu0 0.0
    %438 = vmatpush1.msra.mxu0 %v403
    %439 = vmatprep.subr.mxu0 0.0
    %440 = vmatpush1.msra.mxu0 %v402
    %441 = vmatprep.subr.mxu0 0.0
    %442 = vmatpush1.msra.mxu0 %v401
    %443 = vmatprep.subr.mxu0 0.0
    %444 = vmatpush1.msra.mxu0 %v400
    %445 = vmatprep.subr.mxu0 0.0
    %446 = vmatpush1.msra.mxu0 %v399
    %447 = vmatprep.subr.mxu0 0.0
    %448 = vmatpush1.msra.mxu0 %v398
    %449 = vmatprep.subr.mxu0 0.0
    %450 = vmatpush1.msra.mxu0 %v397
    %451 = vmatprep.subr.mxu0 0.0
    %452 = vmatpush1.msra.mxu0 %v396
    %453 = vmatprep.subr.mxu0 0.0
    %454 = vmatpush1.msra.mxu0 %v395
    %455 = vmatprep.subr.mxu0 0.0
    %456 = vmatpush1.msra.mxu0 %v394
    %457 = vmatprep.subr.mxu0 0.0
    %458 = vmatpush1.msra.mxu0 %v393
    %459 = vmatprep.subr.mxu0 0.0
    %460 = vmatpush1.msra.mxu0 %v392
    %461 = vmatprep.subr.mxu0 0.0
    %462 = vmatpush1.msra.mxu0 %v391
    %463 = vmatprep.subr.mxu0 0.0
    %464 = vmatpush1.msra.mxu0 %v390
    %465 = vmatprep.subr.mxu0 0.0
    %466 = vmatpush2.msra.mxu0 0.0
    %467 = vmatprep.subr.mxu0 0.0
    %468 = vmatpush2.msra.mxu0 0.0
    %469 = vmatprep.subr.mxu0 0.0
    %470 = vmatpush2.msra.mxu0 0.0
    %471 = vmatprep.subr.mxu0 0.0
    %472 = vmatpush2.msra.mxu0 0.0
    %473 = vmatprep.subr.mxu0 0.0
    %474 = vmatpush2.msra.mxu0 0.0
    %475 = vmatprep.subr.mxu0 0.0
    %476 = vmatpush2.msra.mxu0 0.0
    %477 = vmatprep.subr.mxu0 0.0
    %478 = vmatpush2.msra.mxu0 0.0
    %479 = vmatprep.subr.mxu0 0.0
    %480 = vmatpush2.msra.mxu0 0.0
    %481 = vmatprep.subr.mxu0 0.0
    %482 = vmatpush2.msra.mxu0 0.0
    %483 = vmatprep.subr.mxu0 0.0
    %484 = vmatpush2.msra.mxu0 0.0
    %485 = vmatprep.subr.mxu0 0.0
    %486 = vmatpush2.msra.mxu0 0.0
    %487 = vmatprep.subr.mxu0 0.0
    %488 = vmatpush2.msra.mxu0 0.0
    %489 = vmatprep.subr.mxu0 0.0
    %490 = vmatpush2.msra.mxu0 %v409
    %491 = vmatprep.subr.mxu0 0.0
    %492 = vmatpush2.msra.mxu0 %v408
    %493 = vmatprep.subr.mxu0 0.0
    %494 = vmatpush2.msra.mxu0 %v407
    %495 = vmatprep.subr.mxu0 0.0
    %496 = vmatpush2.msra.mxu0 %v406
    %497 = vmatprep.mubr.f32.mxu0 %v425
    %498 = vmatmul.mubr.f32.gmra.mxu0 %v271
    %v499 = vpop.f32.mrf.mxu0
    %v500 = vadd.f32 %v423, %v499
    %v501 = vpop.f32.mrf.mxu0
    %502 = vmatprep.mubr.f32.mxu0 %v427
    %503 = vmatmul.mubr.f32.gmra.mxu0 %v272
    %v504 = vpop.f32.mrf.mxu0
    %v505 = vadd.f32 %v423, %v504
    %v506 = vpop.f32.mrf.mxu0
    %507 = vmatprep.mubr.f32.mxu0 %v429
    %508 = vmatmul.mubr.f32.gmra.mxu0 %v273
    %v509 = vpop.f32.mrf.mxu0
    %v510 = vadd.f32 %v423, %v509
    %v511 = vpop.f32.mrf.mxu0
    %512 = vmatprep.mubr.f32.mxu0 %v431
    %513 = vmatmul.mubr.f32.gmra.mxu0 %v274
    %v514 = vpop.f32.mrf.mxu0
    %v515 = vadd.f32 %v423, %v514
    %v516 = vpop.f32.mrf.mxu0
    %517 = vdwg.mxu0
    %v518 = vmax.f32 %v500, 0.0
    %v519 = vmax.f32 %v505, 0.0
    %v520 = vmax.f32 %v510, 0.0
    %v521 = vmax.f32 %v515, 0.0
    %v522 = vsel %vm212, %v518, -inf
    %vm523 = vcmask 60416
    %v524 = vsel %vm523, %v519, -inf
    %v525 = vmax.f32 %v522, %v524
    %v526 = vrot.slane %v525, 4
    %v527 = vmax.f32 %v525, %v526
    %v528 = vrot.slane %v527, 2
    %v529 = vmax.f32 %v527, %v528
    %v530 = vrot.slane %v529, 1
    %v531 = vmax.f32 %v529, %v530
    %v532 = vsel %vm212, %v520, -inf
    %v533 = vsel %vm523, %v521, -inf
    %v534 = vmax.f32 %v532, %v533
    %v535 = vrot.slane %v534, 4
    %v536 = vmax.f32 %v534, %v535
    %v537 = vrot.slane %v536, 2
    %v538 = vmax.f32 %v536, %v537
    %v539 = vrot.slane %v538, 1
    %v540 = vmax.f32 %v538, %v539
    %v541 = vsel %vm232, %v531, %v540
    %543 = vrot.lane.b32.xlu0 %v389, 8
    %v544 = vpop.permute.xlu0 %543
    %547 = vrot.lane.b32.xlu0 %v541, 16
    %v548 = vpop.permute.xlu0 %547
    %v550 = vsel %vm212, %v233, %v544
    %vm551 = vcmask 130048
    %v552 = vsel %vm551, %v550, %v548
    %v553 = vld [vmem:[%s7] sm:$0xff]
    %v554 = vld [vmem:[%s7 + $0x8] sm:$0xff]
    %v555 = vld [vmem:[%s7 + $0x10] sm:$0xff]
    %v556 = vld [vmem:[%s8] sm:$0x1]
    %v558 = vlaneseq
    %v559 = vshrl.u32 %v558, 7
    %v560 = vsub.s32 0, %v559
    %v561 = vrot.slane %v556, %v560
    %vm563 = vcmask 195584
    %v565 = vsel %vm563, %v552, 0
    %567 = vmatprep.subr.mxu0 0.0
    %568 = vmatpush1.msra.mxu0 0.0
    %569 = vmatprep.subr.mxu0 0.0
    %570 = vmatpush1.msra.mxu0 0.0
    %571 = vmatprep.subr.mxu0 0.0
    %572 = vmatpush1.msra.mxu0 0.0
    %573 = vmatprep.subr.mxu0 0.0
    %574 = vmatpush1.msra.mxu0 0.0
    %575 = vmatprep.subr.mxu0 0.0
    %576 = vmatpush1.msra.mxu0 0.0
    %577 = vmatprep.subr.mxu0 0.0
    %578 = vmatpush1.msra.mxu0 0.0
    %579 = vmatprep.subr.mxu0 0.0
    %580 = vmatpush1.msra.mxu0 0.0
    %581 = vmatprep.subr.mxu0 0.0
    %582 = vmatpush1.msra.mxu0 0.0
    %583 = vmatprep.subr.mxu0 0.0
    %584 = vmatpush1.msra.mxu0 0.0
    %585 = vmatprep.subr.mxu0 0.0
    %586 = vmatpush1.msra.mxu0 0.0
    %587 = vmatprep.subr.mxu0 0.0
    %588 = vmatpush1.msra.mxu0 0.0
    %589 = vmatprep.subr.mxu0 0.0
    %590 = vmatpush1.msra.mxu0 0.0
    %591 = vmatprep.subr.mxu0 0.0
    %592 = vmatpush1.msra.mxu0 0.0
    %593 = vmatprep.subr.mxu0 0.0
    %594 = vmatpush1.msra.mxu0 %v555
    %595 = vmatprep.subr.mxu0 0.0
    %596 = vmatpush1.msra.mxu0 %v554
    %597 = vmatprep.subr.mxu0 0.0
    %598 = vmatpush1.msra.mxu0 %v553
    %599 = vmatprep.subr.mxu0 0.0
    %600 = vmatpush2.msra.mxu0 0.0
    %601 = vmatprep.subr.mxu0 0.0
    %602 = vmatpush2.msra.mxu0 0.0
    %603 = vmatprep.subr.mxu0 0.0
    %604 = vmatpush2.msra.mxu0 0.0
    %605 = vmatprep.subr.mxu0 0.0
    %606 = vmatpush2.msra.mxu0 0.0
    %607 = vmatprep.subr.mxu0 0.0
    %608 = vmatpush2.msra.mxu0 0.0
    %609 = vmatprep.subr.mxu0 0.0
    %610 = vmatpush2.msra.mxu0 0.0
    %611 = vmatprep.subr.mxu0 0.0
    %612 = vmatpush2.msra.mxu0 0.0
    %613 = vmatprep.subr.mxu0 0.0
    %614 = vmatpush2.msra.mxu0 0.0
    %615 = vmatprep.subr.mxu0 0.0
    %616 = vmatpush2.msra.mxu0 0.0
    %617 = vmatprep.subr.mxu0 0.0
    %618 = vmatpush2.msra.mxu0 0.0
    %619 = vmatprep.subr.mxu0 0.0
    %620 = vmatpush2.msra.mxu0 0.0
    %621 = vmatprep.subr.mxu0 0.0
    %622 = vmatpush2.msra.mxu0 0.0
    %623 = vmatprep.subr.mxu0 0.0
    %624 = vmatpush2.msra.mxu0 0.0
    %625 = vmatprep.subr.mxu0 0.0
    %626 = vmatpush2.msra.mxu0 0.0
    %627 = vmatprep.subr.mxu0 0.0
    %628 = vmatpush2.msra.mxu0 0.0
    %629 = vmatprep.subr.mxu0 0.0
    %630 = vmatpush2.msra.mxu0 0.0
    %631 = vmatprep.mubr.f32.mxu0 0.0
    %632 = vmatmul.mubr.f32.gmra.mxu0 %v565
    %v633 = vpop.f32.mrf.mxu0
    %v634 = vadd.f32 %v561, %v633
    %v635 = vpop.f32.mrf.mxu0
    %636 = vdwg.mxu0
    %vm637 = vcmp.gt.f32.partialorder %v634, 0.0
    %v638 = vsel %vm637, 1.0, 0.0
    %vm639 = vcmask 25600
    %640 = vst.msk [vmem:[#allocation2] sm:$0x3] %vm639, %v638
    // Predicated region
    $region38: #{tpu_custom_call.1} parent=1 // pred_check
      _
    $region39: #{tpu_custom_call.1} parent=1 // pred_check_branch
      %642 = sbr.rel (0) target = $region41
    $region40: #{tpu_custom_call.1} parent=1 // pred_region
      %s644 = ssub.s32 32, 32
      %645 = vsyncadd [#allocation3], %s644
      %s647 = sshll.u32 [#allocation2], 4
      %s648 = int_to_ptr.vmem [resolvable:$true] %s647
      %650 = dma.vmem_to_hbm [thread:$0]  %s648, 32, %s9, [#allocation3]
    $region41: #{tpu_custom_call.1} parent=1 // pred_fallthru
      _
    // Predicated region
    $region42: #{tpu_custom_call.1} parent=1 // pred_check
      _
    $region43: #{tpu_custom_call.1} parent=1 // pred_check_branch
      %652 = sbr.rel (0) target = $region45
    $region44: #{tpu_custom_call.1} parent=1 // pred_region
      %653 = dma.done [#allocation3], 32
    $region45: #{tpu_custom_call.1} parent=1 // pred_fallthru
      _
    %654 = vsyncpa [#allocation3], 1

</llo_original>
